<compile_context>
chip_gen: v5e
topology: v5e:2x2
jax: 0.10.0
libtpu: 0.0.40
codegen_flags: <defaults>
</compile_context>

<pallas_src>
import jax
import jax.numpy as jnp
from jax import lax
from jax.experimental import pallas as pl
from jax.experimental.pallas import tpu as pltpu


def _make_kernel(t_chunk, n_chunks, unroll):
    def kernel(b_ref, w_ref, x_ref, y_ref, a_ref):
        # b_ref : SMEM (1,)          conv bias (whole-array, copied once)
        # w_ref : VMEM (C, 1)        1x1 conv weights (out_channels = 1)
        # x_ref : VMEM (nb, C, t)    input block
        # y_ref : VMEM (nb, C, t)    gated output block  x * sigmoid(conv(x))
        # a_ref : VMEM (nb, t)       attention-map block sigmoid(conv(x))
        w_col = w_ref[...][None, :, :]          # (1, C, 1) -- hoisted out of the loop
        bias = b_ref[0]

        def body(i, carry):
            off = pl.multiple_of(i * t_chunk, 128)
            xc = x_ref[:, :, pl.ds(off, t_chunk)]              # (nb, C, tc)
            # 1x1 conv: dense VPU multiply + XLU cross-sublane reduce over C.
            logit = jnp.sum(xc * w_col, axis=1) + bias          # (nb, tc)
            attn = jax.nn.sigmoid(logit)
            a_ref[:, pl.ds(off, t_chunk)] = attn.astype(a_ref.dtype)
            y_ref[:, :, pl.ds(off, t_chunk)] = xc * attn.astype(xc.dtype)[:, None, :]
            return carry

        lax.fori_loop(0, n_chunks, body, 0, unroll=unroll)

    return kernel


def _choose_tiles(N, C, HW_pad, itemsize, x_block_target=4 * 1024 * 1024):
    """Pick (batch_tile nb, spatial_tile t).

    Constraints / preferences:
      * t is a multiple of 128 dividing HW_pad (lane-dense blocks, HW_pad is
        already padded to a multiple of 128 by the wrapper).
      * nb divides N and is N or a multiple of 8 (legal, sublane-dense blocks).
      * the padded x block stays near x_block_target; t >= 512 where HW allows.
      * the grid has >= 2 steps whenever possible (v7x megacore: 2 TCs).
    """
    padded_c = -(-C // 8) * 8
    lanes = HW_pad // 128
    t_cands = sorted({128 * d for d in range(1, lanes + 1) if lanes % d == 0},
                     reverse=True)
    nb_cands = sorted(d for d in range(1, N + 1)
                      if N % d == 0 and (d == N or d % 8 == 0))
    nb_min = nb_cands[0]

    def x_block_bytes(nb, t):
        return nb * padded_c * t * itemsize

    # 1) largest spatial tile fitting the target at the minimum batch tile
    t = next((c for c in t_cands if x_block_bytes(nb_min, c) <= x_block_target),
             t_cands[-1])
    # 2) prefer >= 512-lane DMA runs where HW allows (HBM-bandwidth bound)
    if t < 512:
        bigger = [c for c in t_cands if c >= 512]
        if bigger:
            t = min(bigger)
    # 3) grow the batch tile while the block still fits the target
    nb = nb_min
    for cand in nb_cands:
        if x_block_bytes(cand, t) <= x_block_target:
            nb = cand
    # 4) guarantee >= 2 grid steps when possible so both v7x TCs get work
    if N // nb == 1 and HW_pad // t == 1:
        smaller_t = [c for c in t_cands if c < t]
        smaller_nb = [c for c in nb_cands if c < nb]
        if smaller_t:
            t = smaller_t[0]
        elif smaller_nb:
            nb = smaller_nb[-1]
    return nb, t


def _choose_chunk(t):
    """Lane width of the in-kernel compute chunks (keeps vreg pressure low)."""
    if t <= 512:
        return t
    for c in (512, 256, 128):
        if t % c == 0:
            return c
    return t


def attention_block(x_nchw, weight, bias):
    """x: (N, C, H, W); weight: (1, C, 1, 1); bias: (1,).

    Returns (y, attn) matching the PyTorch module:
      attn = sigmoid(conv1x1(x));  y = x * attn  (attn shape (N, 1, H, W)).
    """
    N, C, H, W = x_nchw.shape
    HW = H * W
    HW_pad = -(-HW // 128) * 128
    dtype = x_nchw.dtype
    itemsize = dtype.itemsize

    x3 = x_nchw.reshape(N, C, HW)
    if HW_pad != HW:
        # Lane-dense stores: pad the spatial axis up to a multiple of 128 and
        # slice the padding back off the outputs (wrapper-side plumbing only).
        x3 = jnp.pad(x3, ((0, 0), (0, 0), (0, HW_pad - HW)))

    nb, t = _choose_tiles(N, C, HW_pad, itemsize)
    grid = (N // nb, HW_pad // t)
    t_chunk = _choose_chunk(t)
    n_chunks = t // t_chunk

    w_col = weight.reshape(C, 1).astype(dtype)
    b = bias.reshape(1).astype(jnp.float32)          # SMEM is 32-bit word based

    # Explicit VMEM budget: double-buffered x, y and attn blocks + the weight
    # column; sublane-padded channel count is what actually lands in VMEM.
    padded_c = -(-C // 8) * 8
    a_rows = nb if nb % 8 == 0 else -(-nb // 8) * 8
    xy_blk = nb * padded_c * t * itemsize
    a_blk = a_rows * t * itemsize
    footprint = 2 * (2 * xy_blk + a_blk) + padded_c * 128 * itemsize
    vmem_limit = max(32 * 1024 * 1024, int(footprint * 1.5))

    kernel = _make_kernel(t_chunk, n_chunks, unroll=n_chunks <= 8)

    y3, a2 = pl.pallas_call(
        kernel,
        out_shape=(
            jax.ShapeDtypeStruct((N, C, HW_pad), dtype),
            jax.ShapeDtypeStruct((N, HW_pad), dtype),
        ),
        grid_spec=pltpu.PrefetchScalarGridSpec(
            num_scalar_prefetch=0,
            grid=grid,
            in_specs=[
                pl.BlockSpec(memory_space=pltpu.SMEM),              # bias (1,)
                pl.BlockSpec((C, 1), lambda n, s: (0, 0)),          # weights
                pl.BlockSpec((nb, C, t), lambda n, s: (n, 0, s)),   # x
            ],
            out_specs=[
                pl.BlockSpec((nb, C, t), lambda n, s: (n, 0, s)),   # y
                pl.BlockSpec((nb, t), lambda n, s: (n, s)),         # attn
            ],
        ),
        compiler_params=pltpu.CompilerParams(
            dimension_semantics=("parallel", "parallel"),
            vmem_limit_bytes=vmem_limit,
        ),
    )(b, w_col, x3)

    y = y3[:, :, :HW].reshape(N, C, H, W)
    attn = a2[:, :HW].reshape(N, 1, H, W)
    return y, attn


def _reference(x_nchw, weight, bias):
    # Plain-JAX reference of the PyTorch forward for sanity checking.
    w = weight.reshape(1, -1, 1, 1)
    logit = jnp.sum(x_nchw * w, axis=1, keepdims=True) + bias.reshape(1, 1, 1, 1)
    attn = jax.nn.sigmoid(logit)
    return x_nchw * attn, attn


if __name__ == "__main__":
    key = jax.random.PRNGKey(0)
    k_x, k_w, k_b = jax.random.split(key, 3)

    N, C, H, W = 2, 4, 16, 16
    x = jax.random.normal(k_x, (N, C, H, W), dtype=jnp.float32)

    # Deterministic synthetic Conv2d(in_channels=C, out_channels=1, k=1) params.
    fan_in = C  # kernel_size 1x1
    bound = 1.0 / (fan_in ** 0.5)
    weight = jax.random.uniform(k_w, (1, C, 1, 1), jnp.float32, -bound, bound)
    bias = jax.random.uniform(k_b, (1,), jnp.float32, -bound, bound)

    y, attn = attention_block(x, weight, bias)
    jax.block_until_ready(y)
    jax.block_until_ready(attn)

    y_ref, attn_ref = _reference(x, weight, bias)
    assert y.shape == (N, C, H, W) and attn.shape == (N, 1, H, W)
    assert jnp.allclose(attn, attn_ref, atol=1e-5, rtol=1e-5)
    assert jnp.allclose(y, y_ref, atol=1e-5, rtol=1e-5)

    print("KERNEL_OK")
</pallas_src>

<mosaic_0001>
module attributes {stable_mosaic.version = 11 : i64} {
  func.func @kernel(%arg0: i32, %arg1: i32, %arg2: memref<1xf32, #tpu.memory_space<smem>>, %arg3: memref<4x1xf32, #tpu.memory_space<vmem>>, %arg4: memref<2x4x128xf32, #tpu.memory_space<vmem>>, %arg5: memref<2x4x128xf32, #tpu.memory_space<vmem>>, %arg6: memref<2x128xf32, #tpu.memory_space<vmem>>) attributes {dimension_semantics = [#tpu.dimension_semantics<parallel>, #tpu.dimension_semantics<parallel>], iteration_bounds = array<i64: 1, 2>, scalar_prefetch = 0 : i64, scratch_operands = 0 : i64, tpu.core_type = #tpu.core_type<tc>, window_params = [{transform_indices = @transform_0, window_bounds = array<i64: 1>}, {pipeline_mode = #tpu.pipeline_mode<synchronous>, transform_indices = @transform_1, window_bounds = array<i64: 4, 1>}, {transform_indices = @transform_2, window_bounds = array<i64: 2, 4, 128>}, {transform_indices = @transform_3, window_bounds = array<i64: 2, 4, 128>}, {transform_indices = @transform_4, window_bounds = array<i64: 2, 128>}]} {
    %c0 = arith.constant 0 : index
    %c0_0 = arith.constant 0 : index
    %0 = vector.load %arg3[%c0, %c0_0] : memref<4x1xf32, #tpu.memory_space<vmem>>, vector<4x1xf32>
    %1 = vector.shape_cast %0 : vector<4x1xf32> to vector<1x4x1xf32>
    %c0_1 = arith.constant 0 : index
    %2 = memref.load %arg2[%c0_1] : memref<1xf32, #tpu.memory_space<smem>>
    %c0_i32 = arith.constant 0 : i32
    %c128_i32 = arith.constant 128 : i32
    %3 = arith.muli %c0_i32, %c128_i32 : i32
    %4 = tpu.assume_multiple %3, 128 : i32
    %c0_2 = arith.constant 0 : index
    %c0_3 = arith.constant 0 : index
    %5 = arith.index_cast %4 : i32 to index
    %6 = vector.load %arg4[%c0_2, %c0_3, %5] : memref<2x4x128xf32, #tpu.memory_space<vmem>>, vector<2x4x128xf32>
    %7 = vector.broadcast %1 : vector<1x4x1xf32> to vector<2x4x128xf32>
    %8 = arith.mulf %6, %7 : vector<2x4x128xf32>
    %cst = arith.constant dense<0.000000e+00> : vector<2x128xf32>
    %9 = vector.multi_reduction <add>, %8, %cst [1] : vector<2x4x128xf32> to vector<2x128xf32>
    %10 = vector.broadcast %2 : f32 to vector<2x128xf32>
    %11 = arith.addf %9, %10 : vector<2x128xf32>
    %12 = arith.negf %11 : vector<2x128xf32>
    %13 = math.exp %12 : vector<2x128xf32>
    %cst_4 = arith.constant 1.000000e+00 : f32
    %14 = vector.broadcast %cst_4 : f32 to vector<2x128xf32>
    %15 = arith.addf %14, %13 : vector<2x128xf32>
    %16 = arith.divf %14, %15 : vector<2x128xf32>
    %c0_5 = arith.constant 0 : index
    %17 = arith.index_cast %4 : i32 to index
    %18 = vector.load %arg6[%c0_5, %17] : memref<2x128xf32, #tpu.memory_space<vmem>>, vector<2x128xf32>
    tpu.vector_store %arg6[%c0_5, %17], %16 {strides = array<i32>} : memref<2x128xf32, #tpu.memory_space<vmem>>, vector<2x128xf32>,
    %19 = vector.shape_cast %16 : vector<2x128xf32> to vector<2x1x128xf32>
    %20 = vector.broadcast %19 : vector<2x1x128xf32> to vector<2x4x128xf32>
    %21 = arith.mulf %6, %20 : vector<2x4x128xf32>
    %c0_6 = arith.constant 0 : index
    %c0_7 = arith.constant 0 : index
    %22 = arith.index_cast %4 : i32 to index
    %23 = vector.load %arg5[%c0_6, %c0_7, %22] : memref<2x4x128xf32, #tpu.memory_space<vmem>>, vector<2x4x128xf32>
    tpu.vector_store %arg5[%c0_6, %c0_7, %22], %21 {strides = array<i32>} : memref<2x4x128xf32, #tpu.memory_space<vmem>>, vector<2x4x128xf32>,
    %c1_i32 = arith.constant 1 : i32
    return
  }
  func.func @transform_0(%arg0: i32, %arg1: i32) -> i32 {
    %c0_i32 = arith.constant 0 : i32
    %c0_i32_0 = arith.constant 0 : i32
    return %c0_i32 : i32
  }
  func.func @transform_1(%arg0: i32, %arg1: i32) -> (i32, i32) {
    %c0_i32 = arith.constant 0 : i32
    %c0_i32_0 = arith.constant 0 : i32
    %c0_i32_1 = arith.constant 0 : i32
    return %c0_i32, %c0_i32_0 : i32, i32
  }
  func.func @transform_2(%arg0: i32, %arg1: i32) -> (i32, i32, i32) {
    %c0_i32 = arith.constant 0 : i32
    %c0_i32_0 = arith.constant 0 : i32
    return %arg0, %c0_i32, %arg1 : i32, i32, i32
  }
  func.func @transform_3(%arg0: i32, %arg1: i32) -> (i32, i32, i32) {
    %c0_i32 = arith.constant 0 : i32
    %c0_i32_0 = arith.constant 0 : i32
    return %arg0, %c0_i32, %arg1 : i32, i32, i32
  }
  func.func @transform_4(%arg0: i32, %arg1: i32) -> (i32, i32) {
    %c0_i32 = arith.constant 0 : i32
    return %arg0, %arg1 : i32, i32
  }
}

</mosaic_0001>

<llo_original>
// kernel: tpu_custom_call.1
$region0: #{tpu_custom_call.1}
  #allocation0 [shape = 'u32[]', space=smem, size = 0x4, offset = 0x4, fixed_abs, tag = 'smem constant byte address 0x4 - core index']
  #allocation1 [shape = 'u32[72,128]{1,0:T(1,128)}', space=vmem, size = 0x9000, scoped, tag = 'internal scratch']
  #allocation2 [shape = 'f32[1]{0:T(128)S(6)}', space=smem, size = 0x200, scoped, tag = 'scoped memory for tpu_custom_call.1']
  %s0 = inlined_call_operand.<no memory space> [shape: f32[1], index: 0, kind: input, shape index: {}]
  %s1 = inlined_call_operand.vmem [shape: f32[4,1], index: 1, kind: input, shape index: {}]
  %s2 = inlined_call_operand.hbm [shape: f32[2,4,256], index: 2, kind: input, shape index: {}]
  %s3 = inlined_call_operand.hbm [shape: f32[2,4,256], index: 3, kind: output, shape index: {0}]
  %s4 = inlined_call_operand.hbm [shape: f32[2,256], index: 4, kind: output, shape index: {1}]
  %5 = xla_tuple %s3, %s4
  %s6 = sld [smem:[#allocation0]]
  $region57: #{tpu_custom_call.1} parent=0
    _
  %s8 = ssub.s32 1, %s6
  %s9 = scalar_select 0, %s8, %s6
  %10 = sst [smem:[#allocation2]] %s0
  $region1: #{tpu_custom_call.1} parent=0
    #allocation3 [shape = 'u8[8192]{0}', space=vmem, size = 0x2000, scoped, tag = 'input window, operand 2']
    #allocation4 [shape = 's32[2]{0}', space=sflag, size = 0x8, scoped, tag = 'scoped memory for tpu_custom_call.1']
    #allocation5 [shape = 's32[2]{0}', space=sflag, size = 0x8, scoped, tag = 'scoped memory for tpu_custom_call.1']
    #allocation6 [shape = 'u8[8192]{0}', space=vmem, size = 0x2000, scoped, tag = 'output window, operand 0']
    #allocation7 [shape = 'u8[2048]{0}', space=vmem, size = 0x800, scoped, tag = 'output window, operand 1']
    #allocation8 [shape = 's32[2]{0}', space=sflag, size = 0x8, scoped, tag = 'scoped memory for tpu_custom_call.1']
    %11 = vsyncpa [#allocation4], 0
    %s12 = scalar_lea.sflag [#allocation4], 1
    %13 = vsyncpa %s12, 0
    %14 = vsyncpa [#allocation5], 0
    %s15 = scalar_lea.sflag [#allocation5], 1
    %16 = vsyncpa %s15, 0
    %17 = vsyncpa [#allocation8], 0
    %s18 = scalar_lea.sflag [#allocation8], 1
    %19 = vsyncpa %s18, 0
    loop: start=0, step=1, limit=4
    $region2: #{tpu_custom_call.1} parent=1 // loop_pre_header
      _
    $region3: #{tpu_custom_call.1} parent=1 // loop_header
      %s21 = sphi 0, %s25
      %p22 = scmp.ge.s32.totalorder %s21, 4
      %s28 = sphi 0, %s40
      %s29 = sphi 0, %s36
      %s30 = sphi 0, %s28
      %s31 = sphi 0, %s29
      %s32 = sphi 0, %s30
      %s33 = sphi 0, %s31
      %s41 = sphi 0, %s41
      %s43 = sphi 0, %s41
      %s44 = sphi 0, %s43
      %s58 = sphi 0, %s44
      %s62 = sphi 0, %s62
      %s64 = sphi 0, %s62
      %s65 = sphi 0, %s64
      %s79 = sphi 0, %s65
      %s87 = sphi 0, %s89
      %s90 = sphi 0, %s87
      %s91 = sphi 0, %s90
      %s107 = sphi 0, %s91
      %s115 = sphi 0, %s117
      %s118 = sphi 0, %s115
      %s119 = sphi 0, %s118
      %s135 = sphi 0, %s119
      %s143 = sphi 0, %s145
      %s146 = sphi 0, %s143
      %s147 = sphi 0, %s146
      %s163 = sphi 0, %s147
    $region4: #{tpu_custom_call.1} parent=1 // loop_header_branch
      %24 = sbr.rel (%p22) target = $region8
    $region5: #{tpu_custom_call.1} parent=1 // loop_body
      %s26 = ssub.s32 %s21, 1
      %s27 = ssub.s32 %s21, 2
      %s34 = sadd.s32 1, %s29
      %p35 = scmp.ge.s32.totalorder %s34, 2
      %s36 = scalar_select %p35, 0, %s34
      %s37 = sadd.s32 1, %s28
      %s38 = scalar_select %p35, %s37, %s28
      %p39 = scmp.ge.s32.totalorder %s38, 1
      %s40 = scalar_select %p39, 0, %s38
      %s42 = sadd.s32 %s41, 1
      %p45 = scmp.eq.s32.totalorder %s21, 1
      %p46 = scmp.ne.s32.totalorder %s41, %s43
      %p47 = scmp.eq.s32.totalorder %s21, 0
      %p48 = por %p46, %p47
      %p49 = scmp.ne.s32.totalorder %s41, %s43
      %p50 = scmp.eq.s32.totalorder %s26, 1
      %p51 = por %p49, %p50
      %p52 = scmp.ne.s32.totalorder %s43, %s44
      %p53 = scmp.eq.s32.totalorder %s26, 0
      %p54 = por %p52, %p53
      %p55 = scmp.ne.s32.totalorder %s43, %s44
      %p56 = scmp.eq.s32.totalorder %s27, 1
      %p57 = por %p55, %p56
      %p59 = scmp.ne.s32.totalorder %s44, %s58
      %p60 = scmp.eq.s32.totalorder %s27, 0
      %p61 = por %p59, %p60
      %s63 = sadd.s32 %s62, 1
      %p66 = scmp.eq.s32.totalorder %s21, 1
      %p67 = scmp.ne.s32.totalorder %s62, %s64
      %p68 = scmp.eq.s32.totalorder %s21, 0
      %p69 = por %p67, %p68
      %p70 = scmp.ne.s32.totalorder %s62, %s64
      %p71 = scmp.eq.s32.totalorder %s26, 1
      %p72 = por %p70, %p71
      %p73 = scmp.ne.s32.totalorder %s64, %s65
      %p74 = scmp.eq.s32.totalorder %s26, 0
      %p75 = por %p73, %p74
      %p76 = scmp.ne.s32.totalorder %s64, %s65
      %p77 = scmp.eq.s32.totalorder %s27, 1
      %p78 = por %p76, %p77
      %p80 = scmp.ne.s32.totalorder %s65, %s79
      %p81 = scmp.eq.s32.totalorder %s27, 0
      %p82 = por %p80, %p81
      %s83 = ssub.s32 %s28, %s40
      %s84 = ssub.s32 %s29, %s36
      %s85 = sor.u32 %s83, %s84
      %p86 = scmp.eq.s32.totalorder %s85, 0
      %s88 = sadd.s32 %s87, 1
      %s89 = scalar_select %p86, %s87, %s88
      %p92 = pneg %p86
      %p93 = scmp.eq.s32.totalorder %s21, 1
      %p94 = por %p92, %p93
      %p95 = scmp.ne.s32.totalorder %s87, %s90
      %p96 = scmp.eq.s32.totalorder %s21, 0
      %p97 = por %p95, %p96
      %p98 = scmp.ne.s32.totalorder %s87, %s90
      %p99 = scmp.eq.s32.totalorder %s26, 1
      %p100 = por %p98, %p99
      %p101 = scmp.ne.s32.totalorder %s90, %s91
      %p102 = scmp.eq.s32.totalorder %s26, 0
      %p103 = por %p101, %p102
      %p104 = scmp.ne.s32.totalorder %s90, %s91
      %p105 = scmp.eq.s32.totalorder %s27, 1
      %p106 = por %p104, %p105
      %p108 = scmp.ne.s32.totalorder %s91, %s107
      %p109 = scmp.eq.s32.totalorder %s27, 0
      %p110 = por %p108, %p109
      %s111 = ssub.s32 %s28, %s40
      %s112 = ssub.s32 %s29, %s36
      %s113 = sor.u32 %s111, %s112
      %p114 = scmp.eq.s32.totalorder %s113, 0
      %s116 = sadd.s32 %s115, 1
      %s117 = scalar_select %p114, %s115, %s116
      %p120 = pneg %p114
      %p121 = scmp.eq.s32.totalorder %s21, 1
      %p122 = por %p120, %p121
      %p123 = scmp.ne.s32.totalorder %s115, %s118
      %p124 = scmp.eq.s32.totalorder %s21, 0
      %p125 = por %p123, %p124
      %p126 = scmp.ne.s32.totalorder %s115, %s118
      %p127 = scmp.eq.s32.totalorder %s26, 1
      %p128 = por %p126, %p127
      %p129 = scmp.ne.s32.totalorder %s118, %s119
      %p130 = scmp.eq.s32.totalorder %s26, 0
      %p131 = por %p129, %p130
      %p132 = scmp.ne.s32.totalorder %s118, %s119
      %p133 = scmp.eq.s32.totalorder %s27, 1
      %p134 = por %p132, %p133
      %p136 = scmp.ne.s32.totalorder %s119, %s135
      %p137 = scmp.eq.s32.totalorder %s27, 0
      %p138 = por %p136, %p137
      %s139 = ssub.s32 %s28, %s40
      %s140 = ssub.s32 %s29, %s36
      %s141 = sor.u32 %s139, %s140
      %p142 = scmp.eq.s32.totalorder %s141, 0
      %s144 = sadd.s32 %s143, 1
      %s145 = scalar_select %p142, %s143, %s144
      %p148 = pneg %p142
      %p149 = scmp.eq.s32.totalorder %s21, 1
      %p150 = por %p148, %p149
      %p151 = scmp.ne.s32.totalorder %s143, %s146
      %p152 = scmp.eq.s32.totalorder %s21, 0
      %p153 = por %p151, %p152
      %p154 = scmp.ne.s32.totalorder %s143, %s146
      %p155 = scmp.eq.s32.totalorder %s26, 1
      %p156 = por %p154, %p155
      %p157 = scmp.ne.s32.totalorder %s146, %s147
      %p158 = scmp.eq.s32.totalorder %s26, 0
      %p159 = por %p157, %p158
      %p160 = scmp.ne.s32.totalorder %s146, %s147
      %p161 = scmp.eq.s32.totalorder %s27, 1
      %p162 = por %p160, %p161
      %p164 = scmp.ne.s32.totalorder %s147, %s163
      %p165 = scmp.eq.s32.totalorder %s27, 0
      %p166 = por %p164, %p165
      %p167 = scmp.le.s32.totalorder 1, %s21
      %p168 = scmp.lt.s32.totalorder %s21, 3
      %p169 = pnand %p167, %p168
      %p170 = pneg %p169
      // Predicated region
      $region9: #{tpu_custom_call.1} parent=5 // pred_check
        _
      $region10: #{tpu_custom_call.1} parent=5 // pred_check_branch
        %172 = sbr.rel (%p169) target = $region12
      $region11: #{tpu_custom_call.1} parent=5 // pred_region
        %s173 = ssub.s32 %s21, 1
        // Predicated region
        $region13: #{tpu_custom_call.1} parent=11 // pred_check
          %p174 = pneg %p54
        $region14: #{tpu_custom_call.1} parent=11 // pred_check_branch
          %176 = sbr.rel (%p174) target = $region16
        $region15: #{tpu_custom_call.1} parent=11 // pred_region
          _
        $region16: #{tpu_custom_call.1} parent=11 // pred_fallthru
          _
        // Predicated region
        $region17: #{tpu_custom_call.1} parent=11 // pred_check
          %p177 = pneg %p75
        $region18: #{tpu_custom_call.1} parent=11 // pred_check_branch
          %179 = sbr.rel (%p177) target = $region20
        $region19: #{tpu_custom_call.1} parent=11 // pred_region
          _
        $region20: #{tpu_custom_call.1} parent=11 // pred_fallthru
          _
      $region12: #{tpu_custom_call.1} parent=5 // pred_fallthru
        _
      %p180 = scmp.lt.s32.totalorder %s21, 2
      // Predicated region
      $region21: #{tpu_custom_call.1} parent=5 // pred_check
        %p181 = pneg %p180
      $region22: #{tpu_custom_call.1} parent=5 // pred_check_branch
        %183 = sbr.rel (%p181) target = $region24
      $region23: #{tpu_custom_call.1} parent=5 // pred_region
        // Predicated region
        $region25: #{tpu_custom_call.1} parent=23 // pred_check
          %p184 = pneg %p97
        $region26: #{tpu_custom_call.1} parent=23 // pred_check_branch
          %186 = sbr.rel (%p184) target = $region28
        $region27: #{tpu_custom_call.1} parent=23 // pred_region
          %s187 = sand.u32 %s87, 1
          %s188 = scalar_lea.sflag [#allocation4], %s187
          %s189 = sand.u32 %s87, 1
          %s190 = smul.addr %s189, 8
          %s191 = scalar_lea.vmem [#allocation3], %s190
          %s192 = smul.u32 2, %s28
          %194 = vsyncadd %s188, 0
          %s195 = smul.addr %s192, 2
          %s196 = sadd.s32 %s29, %s195
          %s197 = smul.addr %s196, 4
          %s198 = scalar_lea.hbm %s2, %s197
          %s199 = sshll.u32 %s198, 4
          %s200 = int_to_ptr.hbm [resolvable:$true] %s199
          %s201 = sshll.u32 %s191, 4
          %s202 = int_to_ptr.vmem [resolvable:$true] %s201
          %207 = dma.hbm_to_vmem [thread:$0]  %s200, 128, %s202, %s188, 128, 64, 4
        $region28: #{tpu_custom_call.1} parent=23 // pred_fallthru
          _
      $region24: #{tpu_custom_call.1} parent=5 // pred_fallthru
        _
      %p208 = scmp.le.s32.totalorder 1, %s21
      %p209 = scmp.lt.s32.totalorder %s21, 3
      %p210 = pnand %p208, %p209
      %p211 = pneg %p210
      // Predicated region
      $region29: #{tpu_custom_call.1} parent=5 // pred_check
        _
      $region30: #{tpu_custom_call.1} parent=5 // pred_check_branch
        %213 = sbr.rel (%p210) target = $region32
      $region31: #{tpu_custom_call.1} parent=5 // pred_region
        %s214 = ssub.s32 %s21, 1
        %s215 = sand.u32 %s90, 1
        %s216 = scalar_lea.sflag [#allocation4], %s215
        %s217 = sand.u32 %s90, 1
        %s218 = smul.addr %s217, 8
        %s219 = scalar_lea.vmem [#allocation3], %s218
        // Predicated region
        $region33: #{tpu_custom_call.1} parent=31 // pred_check
          %p220 = pneg %p103
        $region34: #{tpu_custom_call.1} parent=31 // pred_check_branch
          %222 = sbr.rel (%p220) target = $region36
        $region35: #{tpu_custom_call.1} parent=31 // pred_region
          %224 = dma.done %s216, 128
        $region36: #{tpu_custom_call.1} parent=31 // pred_fallthru
          _
        %p225 = pneg %p54
        %p226 = pneg %p51
        %p227 = pneg %p75
        %p228 = pneg %p72
        %s229 = sand.u32 %s90, 1
        %s230 = scalar_lea.sflag [#allocation4], %s229
        %s231 = sand.u32 %s90, 1
        %s232 = smul.addr %s231, 8
        %s233 = scalar_lea.vmem [#allocation3], %s232
        %p234 = pneg %p103
        %p235 = pneg %p100
        %p236 = pneg %p131
        %p237 = pneg %p128
        %s238 = sand.u32 %s118, 1
        %s239 = scalar_lea.sflag [#allocation5], %s238
        %s240 = sand.u32 %s118, 1
        %s241 = smul.addr %s240, 8
        %s242 = scalar_lea.vmem [#allocation6], %s241
        %p243 = pneg %p159
        %p244 = pneg %p156
        %s245 = sand.u32 %s146, 1
        %s246 = scalar_lea.sflag [#allocation8], %s245
        %s247 = sand.u32 %s146, 1
        %s248 = smul.addr %s247, 2
        %s249 = scalar_lea.vmem [#allocation7], %s248
        %s250 = smul.u32 2, %s30
        %s251 = smul.u32 2, %s30
        %v252 = vld [vmem:[%s1] sm:$0xf]
        %s253 = sld [smem:[#allocation2]]
        %v254 = vld [vmem:[%s219] sm:$0xf]
        %v255 = vld [vmem:[%s219 + $0x4] sm:$0xf]
        %257 = vset.pattern.permute.xlu0 0
        %258 = vperm.xlu0 %257, %v252
        %v259 = vpop.permute.xlu0 %258
        %v261 = vmul.f32 %v254, %v259
        %v262 = vmul.f32 %v255, %v259
        %vm263 = vcmask 1043456
        %v264 = vsel %vm263, %v261, 0.0
        %v265 = vrot.slane %v264, 4
        %v266 = vadd.f32 %v264, %v265
        %v267 = vrot.slane %v266, 2
        %v268 = vadd.f32 %v266, %v267
        %v269 = vrot.slane %v268, 1
        %v270 = vadd.f32 %v268, %v269
        %v271 = vsel %vm263, %v262, 0.0
        %v272 = vrot.slane %v271, 4
        %v273 = vadd.f32 %v271, %v272
        %v274 = vrot.slane %v273, 2
        %v275 = vadd.f32 %v273, %v274
        %v276 = vrot.slane %v275, 1
        %v277 = vadd.f32 %v275, %v276
        %v278 = vstv %s253
        %v279 = vadd.f32 %v270, %v278
        %v280 = vadd.f32 %v277, %v278
        %v281 = vxor.u32 %v279, 2147483648
        %v282 = vxor.u32 %v280, 2147483648
        %v283 = vmul.f32 %v281, 1.442695
        %v284 = vpow.pop %v283
        %v285 = vmul.f32 %v282, 1.442695
        %v286 = vpow.pop %v285
        %v287 = vadd.f32 %v284, 1.0
        %v288 = vadd.f32 %v286, 1.0
        %v289 = vrcp.pop %v287
        %v290 = vmul.f32 %v287, %v289
        %v291 = vsub.f32 1.0, %v290
        %v292 = vmul.f32 %v289, %v291
        %v293 = vadd.f32 %v289, %v292
        %vm294 = vweird.f32 %v287
        %vm295 = vweird.f32 %v289
        %vm296 = vmor %vm294, %vm295
        %v297 = vsel %vm296, %v289, %v293
        %v298 = vand.u32 2147483647, %v287
        %vm299 = vcmp.eq.f32.partialorder %v298, 8.507059e+37
        %v300 = vand.u32 %v287, 2147483648
        %v301 = vor.u32 1.1754944e-38, %v300
        %v302 = vsel %vm299, %v301, %v297
        %v303 = vmul.f32 1.0, %v302
        %v304 = vrcp.pop %v288
        %v305 = vmul.f32 %v288, %v304
        %v306 = vsub.f32 1.0, %v305
        %v307 = vmul.f32 %v304, %v306
        %v308 = vadd.f32 %v304, %v307
        %vm309 = vweird.f32 %v288
        %vm310 = vweird.f32 %v304
        %vm311 = vmor %vm309, %vm310
        %v312 = vsel %vm311, %v304, %v308
        %v313 = vand.u32 2147483647, %v288
        %vm314 = vcmp.eq.f32.partialorder %v313, 8.507059e+37
        %v315 = vand.u32 %v288, 2147483648
        %v316 = vor.u32 1.1754944e-38, %v315
        %v317 = vsel %vm314, %v316, %v312
        %v318 = vmul.f32 1.0, %v317
        %vm321 = vcmask 1041409
        %v322 = vsel %vm321, %v318, %v303
        %324 = vst [vmem:[%s249] sm:$0x3] %v322
        %v325 = vmul.f32 %v254, %v303
        %v326 = vmul.f32 %v255, %v318
        %327 = vst [vmem:[%s242] sm:$0xf] %v325
        %328 = vst [vmem:[%s242 + $0x4] sm:$0xf] %v326
        %s329 = sand.u32 %s118, 1
        %s330 = scalar_lea.sflag [#allocation5], %s329
        %s331 = sand.u32 %s118, 1
        %s332 = smul.addr %s331, 8
        %s333 = scalar_lea.vmem [#allocation6], %s332
        %s334 = sand.u32 %s146, 1
        %s335 = scalar_lea.sflag [#allocation8], %s334
        %s336 = sand.u32 %s146, 1
        %s337 = smul.addr %s336, 2
        %s338 = scalar_lea.vmem [#allocation7], %s337
        // Predicated region
        $region37: #{tpu_custom_call.1} parent=31 // pred_check
          %p339 = pneg %p128
        $region38: #{tpu_custom_call.1} parent=31 // pred_check_branch
          %341 = sbr.rel (%p339) target = $region40
        $region39: #{tpu_custom_call.1} parent=31 // pred_region
          %s342 = smul.u32 2, %s30
          %344 = vsyncadd %s330, 0
          %s345 = smul.addr %s342, 2
          %s346 = sadd.s32 %s31, %s345
          %s347 = smul.addr %s346, 4
          %s348 = scalar_lea.hbm %s3, %s347
          %s349 = sshll.u32 %s333, 4
          %s350 = int_to_ptr.vmem [resolvable:$true] %s349
          %s351 = sshll.u32 %s348, 4
          %s352 = int_to_ptr.hbm [resolvable:$true] %s351
          %357 = dma.vmem_to_hbm [thread:$0]  %s350, 128, %s352, %s330, 64, 128, 4
        $region40: #{tpu_custom_call.1} parent=31 // pred_fallthru
          _
        // Predicated region
        $region41: #{tpu_custom_call.1} parent=31 // pred_check
          %p358 = pneg %p156
        $region42: #{tpu_custom_call.1} parent=31 // pred_check_branch
          %360 = sbr.rel (%p358) target = $region44
        $region43: #{tpu_custom_call.1} parent=31 // pred_region
          %362 = vsyncadd %s335, 0
          %s363 = smul.addr %s30, 2
          %s364 = sadd.s32 %s31, %s363
          %s365 = smul.addr %s364, 2
          %s366 = scalar_lea.hbm %s4, %s365
          %s368 = sshll.u32 %s338, 4
          %s369 = int_to_ptr.vmem [resolvable:$true] %s368
          %s370 = sshll.u32 %s366, 4
          %s371 = int_to_ptr.hbm [resolvable:$true] %s370
          %373 = dma.vmem_to_hbm [thread:$0]  %s369, 32, %s371, %s335
        $region44: #{tpu_custom_call.1} parent=31 // pred_fallthru
          _
      $region32: #{tpu_custom_call.1} parent=5 // pred_fallthru
        _
      %p374 = scmp.le.s32.totalorder 2, %s21
      // Predicated region
      $region45: #{tpu_custom_call.1} parent=5 // pred_check
        %p375 = pneg %p374
      $region46: #{tpu_custom_call.1} parent=5 // pred_check_branch
        %377 = sbr.rel (%p375) target = $region48
      $region47: #{tpu_custom_call.1} parent=5 // pred_region
        %s378 = ssub.s32 %s21, 2
        // Predicated region
        $region49: #{tpu_custom_call.1} parent=47 // pred_check
          %p379 = pneg %p134
        $region50: #{tpu_custom_call.1} parent=47 // pred_check_branch
          %381 = sbr.rel (%p379) target = $region52
        $region51: #{tpu_custom_call.1} parent=47 // pred_region
          %s382 = sand.u32 %s119, 1
          %s383 = scalar_lea.sflag [#allocation5], %s382
          %s384 = sand.u32 %s119, 1
          %s385 = smul.addr %s384, 8
          %s386 = scalar_lea.vmem [#allocation6], %s385
          %388 = dma.done %s383, 128
        $region52: #{tpu_custom_call.1} parent=47 // pred_fallthru
          _
        // Predicated region
        $region53: #{tpu_custom_call.1} parent=47 // pred_check
          %p389 = pneg %p162
        $region54: #{tpu_custom_call.1} parent=47 // pred_check_branch
          %391 = sbr.rel (%p389) target = $region56
        $region55: #{tpu_custom_call.1} parent=47 // pred_region
          %s392 = sand.u32 %s147, 1
          %s393 = scalar_lea.sflag [#allocation8], %s392
          %s394 = sand.u32 %s147, 1
          %s395 = smul.addr %s394, 2
          %s396 = scalar_lea.vmem [#allocation7], %s395
          %398 = dma.done %s393, 32
        $region56: #{tpu_custom_call.1} parent=47 // pred_fallthru
          _
      $region48: #{tpu_custom_call.1} parent=5 // pred_fallthru
        _
    $region6: #{tpu_custom_call.1} parent=1 // loop_footer
      %s25 = sadd.s32 1, %s21
    $region7: #{tpu_custom_call.1} parent=1 // loop_footer_branch
      %20 = sbr.rel target = $region3
    $region8: #{tpu_custom_call.1} parent=1 // loop_exit
      _
    %399 = vsyncpa [#allocation4], 1
    %s400 = scalar_lea.sflag [#allocation4], 1
    %401 = vsyncpa %s400, 1
    %402 = vsyncpa [#allocation5], 1
    %s403 = scalar_lea.sflag [#allocation5], 1
    %404 = vsyncpa %s403, 1
    %405 = vsyncpa [#allocation8], 1
    %s406 = scalar_lea.sflag [#allocation8], 1
    %407 = vsyncpa %s406, 1

</llo_original>
